<compile_context>
chip_gen: v7x
topology: tpu7x:2x2x1
jax: 0.10.0
libtpu: 0.0.40
codegen_flags: <defaults>
</compile_context>

<pallas_src>
import math
import functools

import jax
import jax.numpy as jnp
from jax import lax
from jax.experimental import pallas as pl
from jax.experimental.pallas import tpu as pltpu


NEG_INF = -1e30
# Raised above the 16/32 MiB scoped defaults, still below v7x's 64 MiB physical VMEM.
VMEM_LIMIT_BYTES = 48 * 1024 * 1024


def _pick_tile(n, cap):
    """Largest tile size <= cap that divides n."""
    t = min(n, cap)
    while n % t:
        t -= 1
    return t


def _layernorm(h, w, b, eps=1e-5):
    mu = jnp.mean(h, axis=-1, keepdims=True)
    var = jnp.mean((h - mu) ** 2, axis=-1, keepdims=True)
    return (h - mu) * lax.rsqrt(var + eps) * w + b


# ---------------------------------------------------------------------------
# Kernel 1: ln_1 + QKV projection.  Outputs q, k, v as (B, H, T, hd) bf16,
# with the attention scale folded into q (O(T*hd) multiplies instead of O(T^2)).
# ---------------------------------------------------------------------------
def _qkv_kernel(n_head, head_dim,
                x_ref, ln1w_ref, ln1b_ref, wqkv_ref, bqkv_ref,
                q_ref, k_ref, v_ref):
    C = n_head * head_dim
    x = x_ref[0]                                        # (bt, C) f32
    h = _layernorm(x, ln1w_ref[0], ln1b_ref[0])         # f32 vector math
    qkv = jnp.dot(h.astype(wqkv_ref.dtype), wqkv_ref[...],
                  preferred_element_type=jnp.float32) + bqkv_ref[0]   # (bt, 3C) f32

    scale = 1.0 / math.sqrt(head_dim)
    # Static per-head slice/stores (data movement only; n_head is small and this is
    # outside the attention inner loop).
    for hh in range(n_head):
        lo = hh * head_dim
        q_ref[0, hh] = (qkv[:, lo:lo + head_dim] * scale).astype(q_ref.dtype)
        k_ref[0, hh] = qkv[:, C + lo:C + lo + head_dim].astype(k_ref.dtype)
        v_ref[0, hh] = qkv[:, 2 * C + lo:2 * C + lo + head_dim].astype(v_ref.dtype)


# ---------------------------------------------------------------------------
# Kernel 2: causal flash attention, batched over heads with einsum.
# Grid = (B, q_tiles, kv_tiles); kv axis is the (arbitrary) reduction axis.
# ---------------------------------------------------------------------------
def _flash_attn_kernel(n_head, head_dim, block_q, block_k,
                       q_ref, k_ref, v_ref, y_ref,
                       m_sc, l_sc, acc_sc):
    qi = pl.program_id(1)
    ki = pl.program_id(2)
    nk = pl.num_programs(2)

    @pl.when(ki == 0)
    def _init():
        m_sc[...] = jnp.full_like(m_sc, NEG_INF)
        l_sc[...] = jnp.zeros_like(l_sc)
        acc_sc[...] = jnp.zeros_like(acc_sc)

    # Causal block-sparsity: skip KV tiles that lie entirely above the diagonal.
    @pl.when(qi * block_q + block_q - 1 >= ki * block_k)
    def _compute():
        q = q_ref[0]                                    # (H, bq, hd) bf16, pre-scaled
        k = k_ref[0]                                    # (H, bk, hd) bf16
        v = v_ref[0]                                    # (H, bk, hd) bf16

        s = jnp.einsum('hqd,hkd->hqk', q, k,
                       preferred_element_type=jnp.float32)   # (H, bq, bk) f32

        row = qi * block_q + lax.broadcasted_iota(jnp.int32, (block_q, block_k), 0)
        col = ki * block_k + lax.broadcasted_iota(jnp.int32, (block_q, block_k), 1)
        s = s + jnp.where(row >= col, 0.0, NEG_INF)[None, :, :]   # additive causal bias

        m_prev = m_sc[...]                              # (H, bq, 1)
        m_new = jnp.maximum(m_prev, s.max(axis=-1, keepdims=True))
        alpha = jnp.exp(m_prev - m_new)
        p = jnp.exp(s - m_new)
        l_sc[...] = alpha * l_sc[...] + p.sum(axis=-1, keepdims=True)
        acc_sc[...] = alpha * acc_sc[...] + jnp.einsum(
            'hqk,hkd->hqd', p.astype(v.dtype), v,
            preferred_element_type=jnp.float32)
        m_sc[...] = m_new

    @pl.when(ki == nk - 1)
    def _finalize():
        inv_l = pl.reciprocal(l_sc[...], approx=True)   # EUP slot, ~free
        out = acc_sc[...] * inv_l                       # (H, bq, hd) f32
        # Pack heads back to a lane-dense (bq, C) tile once per q tile.
        y = jnp.concatenate([out[hh] for hh in range(n_head)], axis=-1)
        y_ref[0] = y.astype(y_ref.dtype)


# ---------------------------------------------------------------------------
# Kernel 3: attention out-proj + residual, ln_2, MLP (exact GELU) + residual.
# ---------------------------------------------------------------------------
def _proj_mlp_kernel(x_ref, y_ref, wap_ref, bap_ref, ln2w_ref, ln2b_ref,
                     wfc_ref, bfc_ref, wmp_ref, bmp_ref, o_ref):
    x = x_ref[0]                                        # (bt, C) f32
    y = y_ref[0]                                        # (bt, C) bf16
    attn_out = jnp.dot(y, wap_ref[...],
                       preferred_element_type=jnp.float32) + bap_ref[0]
    x1 = x + attn_out

    h2 = _layernorm(x1, ln2w_ref[0], ln2b_ref[0])       # f32
    f = jnp.dot(h2.astype(wfc_ref.dtype), wfc_ref[...],
                preferred_element_type=jnp.float32) + bfc_ref[0]
    f = jax.nn.gelu(f, approximate=False)               # nn.GELU() default = exact erf GELU
    m_out = jnp.dot(f.astype(wmp_ref.dtype), wmp_ref[...],
                    preferred_element_type=jnp.float32) + bmp_ref[0]
    o_ref[0] = (x1 + m_out).astype(o_ref.dtype)


# ---------------------------------------------------------------------------
# Wrapper
# ---------------------------------------------------------------------------
def gpt_block_pallas(x, params, n_head, *,
                     block_t=256, block_q=128, block_k=128,
                     compute_dtype=jnp.bfloat16):
    B, T, C = x.shape
    assert C % n_head == 0
    hd = C // n_head

    bt = _pick_tile(T, block_t)
    bq = _pick_tile(T, block_q)
    bk = _pick_tile(T, block_k)
    nt, nq, nk = T // bt, T // bq, T // bk

    p = params
    # bf16 weights for MXU inputs (f32 accumulation inside the kernels).
    wqkv = p["w_qkv"].astype(compute_dtype)
    wap = p["w_attn_proj"].astype(compute_dtype)
    wfc = p["w_fc"].astype(compute_dtype)
    wmp = p["w_mlp_proj"].astype(compute_dtype)

    def const_spec(arr):
        nd = arr.ndim
        return pl.BlockSpec(arr.shape, lambda *_: (0,) * nd)
    # TODO(synk): constant-index weights are still double-buffered by default; at very
    # large C use pl.Buffered(1) / manual staging (and tile the 4C MLP dim) to cut VMEM.

    # ---- kernel 1: ln_1 + qkv ----
    qkv_shape = jax.ShapeDtypeStruct((B, n_head, T, hd), compute_dtype)
    qkv_spec = lambda: pl.BlockSpec((1, n_head, bt, hd), lambda b, i: (b, 0, i, 0))
    q, k, v = pl.pallas_call(
        functools.partial(_qkv_kernel, n_head, hd),
        out_shape=(qkv_shape, qkv_shape, qkv_shape),
        grid_spec=pltpu.PrefetchScalarGridSpec(
            num_scalar_prefetch=0,
            grid=(B, nt),
            in_specs=[
                pl.BlockSpec((1, bt, C), lambda b, i: (b, i, 0)),
                const_spec(p["ln1_w"]), const_spec(p["ln1_b"]),
                const_spec(wqkv), const_spec(p["b_qkv"]),
            ],
            out_specs=[qkv_spec(), qkv_spec(), qkv_spec()],
        ),
        compiler_params=pltpu.CompilerParams(
            dimension_semantics=("parallel", "parallel"),
            vmem_limit_bytes=VMEM_LIMIT_BYTES),
    )(x, p["ln1_w"], p["ln1_b"], wqkv, p["b_qkv"])

    # ---- kernel 2: flash attention ----
    y = pl.pallas_call(
        functools.partial(_flash_attn_kernel, n_head, hd, bq, bk),
        out_shape=jax.ShapeDtypeStruct((B, T, C), compute_dtype),
        grid_spec=pltpu.PrefetchScalarGridSpec(
            num_scalar_prefetch=0,
            grid=(B, nq, nk),
            in_specs=[
                pl.BlockSpec((1, n_head, bq, hd), lambda b, i, j: (b, 0, i, 0)),
                pl.BlockSpec((1, n_head, bk, hd), lambda b, i, j: (b, 0, j, 0)),
                pl.BlockSpec((1, n_head, bk, hd), lambda b, i, j: (b, 0, j, 0)),
            ],
            out_specs=pl.BlockSpec((1, bq, C), lambda b, i, j: (b, i, 0)),
            scratch_shapes=[
                pltpu.VMEM((n_head, bq, 1), jnp.float32),    # running max
                pltpu.VMEM((n_head, bq, 1), jnp.float32),    # running denom
                pltpu.VMEM((n_head, bq, hd), jnp.float32),   # accumulator
            ],
        ),
        compiler_params=pltpu.CompilerParams(
            dimension_semantics=("parallel", "parallel", "arbitrary"),
            vmem_limit_bytes=VMEM_LIMIT_BYTES),
    )(q, k, v)

    # ---- kernel 3: out-proj + residual + ln_2 + MLP + residual ----
    out = pl.pallas_call(
        _proj_mlp_kernel,
        out_shape=jax.ShapeDtypeStruct((B, T, C), x.dtype),
        grid_spec=pltpu.PrefetchScalarGridSpec(
            num_scalar_prefetch=0,
            grid=(B, nt),
            in_specs=[
                pl.BlockSpec((1, bt, C), lambda b, i: (b, i, 0)),   # x (residual)
                pl.BlockSpec((1, bt, C), lambda b, i: (b, i, 0)),   # y (attention out)
                const_spec(wap), const_spec(p["b_attn_proj"]),
                const_spec(p["ln2_w"]), const_spec(p["ln2_b"]),
                const_spec(wfc), const_spec(p["b_fc"]),
                const_spec(wmp), const_spec(p["b_mlp_proj"]),
            ],
            out_specs=pl.BlockSpec((1, bt, C), lambda b, i: (b, i, 0)),
        ),
        compiler_params=pltpu.CompilerParams(
            dimension_semantics=("parallel", "parallel"),
            vmem_limit_bytes=VMEM_LIMIT_BYTES),
    )(x, y, wap, p["b_attn_proj"], p["ln2_w"], p["ln2_b"],
      wfc, p["b_fc"], wmp, p["b_mlp_proj"])
    return out


# ---------------- pure-JAX f32 reference (mirrors the PyTorch forward) ----------------
def gpt_block_ref(x, p, n_head):
    B, T, C = x.shape
    hd = C // n_head

    def ln(h, w, b):
        mu = jnp.mean(h, axis=-1, keepdims=True)
        var = jnp.mean((h - mu) ** 2, axis=-1, keepdims=True)
        return (h - mu) / jnp.sqrt(var + 1e-5) * w[0] + b[0]

    h = ln(x, p["ln1_w"], p["ln1_b"])
    qkv = h @ p["w_qkv"] + p["b_qkv"][0]
    q, k, v = jnp.split(qkv, 3, axis=-1)
    q = q.reshape(B, T, n_head, hd).transpose(0, 2, 1, 3)
    k = k.reshape(B, T, n_head, hd).transpose(0, 2, 1, 3)
    v = v.reshape(B, T, n_head, hd).transpose(0, 2, 1, 3)
    att = (q @ jnp.swapaxes(k, -2, -1)) / math.sqrt(hd)
    mask = jnp.tril(jnp.ones((T, T), bool))
    att = jnp.where(mask[None, None], att, -jnp.inf)
    att = jax.nn.softmax(att, axis=-1)
    y = (att @ v).transpose(0, 2, 1, 3).reshape(B, T, C)
    x1 = x + (y @ p["w_attn_proj"] + p["b_attn_proj"][0])
    h2 = ln(x1, p["ln2_w"], p["ln2_b"])
    f = jax.nn.gelu(h2 @ p["w_fc"] + p["b_fc"][0], approximate=False)
    return x1 + (f @ p["w_mlp_proj"] + p["b_mlp_proj"][0])


if __name__ == "__main__":
    B, T, C, n_head = 2, 8, 32, 4

    key = jax.random.PRNGKey(0)
    ks = jax.random.split(key, 12)

    def nrm(k, shape, s=0.02):
        return (s * jax.random.normal(k, shape)).astype(jnp.float32)

    params = {
        "ln1_w": jnp.ones((1, C), jnp.float32),
        "ln1_b": jnp.zeros((1, C), jnp.float32),
        "w_qkv": nrm(ks[0], (C, 3 * C)),
        "b_qkv": nrm(ks[1], (1, 3 * C)),
        "w_attn_proj": nrm(ks[2], (C, C)),
        "b_attn_proj": nrm(ks[3], (1, C)),
        "ln2_w": jnp.ones((1, C), jnp.float32),
        "ln2_b": jnp.zeros((1, C), jnp.float32),
        "w_fc": nrm(ks[4], (C, 4 * C)),
        "b_fc": nrm(ks[5], (1, 4 * C)),
        "w_mlp_proj": nrm(ks[6], (4 * C, C)),
        "b_mlp_proj": nrm(ks[7], (1, C)),
    }

    x = jax.random.normal(ks[8], (B, T, C), jnp.float32)

    out = gpt_block_pallas(x, params, n_head)
    out = jax.block_until_ready(out)

    ref = gpt_block_ref(x, params, n_head)
    assert out.shape == (B, T, C)
    max_err = float(jnp.max(jnp.abs(out - ref)))
    # bf16 matmul inputs (f32 accumulation) => looser tolerance vs the pure-f32 reference.
    assert jnp.allclose(out, ref, atol=2e-2, rtol=2e-2), max_err

    # TODO(synk): dropout layers are identity here (eval mode); PyTorch's breakpoint() is a no-op.
    print("KERNEL_OK")
</pallas_src>

<mosaic_0001>
module attributes {stable_mosaic.version = 11 : i64} {
  func.func @_qkv_kernel(%arg0: i32, %arg1: i32, %arg2: memref<1x8x32xf32, #tpu.memory_space<vmem>>, %arg3: memref<1x32xf32, #tpu.memory_space<vmem>>, %arg4: memref<1x32xf32, #tpu.memory_space<vmem>>, %arg5: memref<32x96xbf16, #tpu.memory_space<vmem>>, %arg6: memref<1x96xf32, #tpu.memory_space<vmem>>, %arg7: memref<1x4x8x8xbf16, #tpu.memory_space<vmem>>, %arg8: memref<1x4x8x8xbf16, #tpu.memory_space<vmem>>, %arg9: memref<1x4x8x8xbf16, #tpu.memory_space<vmem>>) attributes {dimension_semantics = [#tpu.dimension_semantics<parallel>, #tpu.dimension_semantics<parallel>], iteration_bounds = array<i64: 2, 1>, scalar_prefetch = 0 : i64, scratch_operands = 0 : i64, tpu.core_type = #tpu.core_type<tc>, window_params = [{transform_indices = @transform_0, window_bounds = array<i64: 1, 8, 32>}, {pipeline_mode = #tpu.pipeline_mode<synchronous>, transform_indices = @transform_1, window_bounds = array<i64: 1, 32>}, {pipeline_mode = #tpu.pipeline_mode<synchronous>, transform_indices = @transform_2, window_bounds = array<i64: 1, 32>}, {pipeline_mode = #tpu.pipeline_mode<synchronous>, transform_indices = @transform_3, window_bounds = array<i64: 32, 96>}, {pipeline_mode = #tpu.pipeline_mode<synchronous>, transform_indices = @transform_4, window_bounds = array<i64: 1, 96>}, {transform_indices = @transform_5, window_bounds = array<i64: 1, 4, 8, 8>}, {transform_indices = @transform_6, window_bounds = array<i64: 1, 4, 8, 8>}, {transform_indices = @transform_7, window_bounds = array<i64: 1, 4, 8, 8>}]} {
    %c0 = arith.constant 0 : index
    %c0_0 = arith.constant 0 : index
    %c0_1 = arith.constant 0 : index
    %0 = vector.load %arg2[%c0, %c0_0, %c0_1] : memref<1x8x32xf32, #tpu.memory_space<vmem>>, vector<1x8x32xf32>
    %1 = vector.shape_cast %0 : vector<1x8x32xf32> to vector<8x32xf32>
    %c0_2 = arith.constant 0 : index
    %c0_3 = arith.constant 0 : index
    %2 = vector.load %arg3[%c0_2, %c0_3] : memref<1x32xf32, #tpu.memory_space<vmem>>, vector<1x32xf32>
    %3 = vector.shape_cast %2 : vector<1x32xf32> to vector<32xf32>
    %c0_4 = arith.constant 0 : index
    %c0_5 = arith.constant 0 : index
    %4 = vector.load %arg4[%c0_4, %c0_5] : memref<1x32xf32, #tpu.memory_space<vmem>>, vector<1x32xf32>
    %5 = vector.shape_cast %4 : vector<1x32xf32> to vector<32xf32>
    %cst = arith.constant dense<0.000000e+00> : vector<8xf32>
    %6 = vector.multi_reduction <add>, %1, %cst [1] : vector<8x32xf32> to vector<8xf32>
    %7 = vector.shape_cast %6 : vector<8xf32> to vector<8x1xf32>
    %cst_6 = arith.constant 3.200000e+01 : f32
    %8 = vector.broadcast %cst_6 : f32 to vector<8x1xf32>
    %9 = arith.divf %7, %8 : vector<8x1xf32>
    %10 = vector.broadcast %9 : vector<8x1xf32> to vector<8x32xf32>
    %11 = arith.subf %1, %10 : vector<8x32xf32>
    %12 = arith.mulf %11, %11 : vector<8x32xf32>
    %cst_7 = arith.constant dense<0.000000e+00> : vector<8xf32>
    %13 = vector.multi_reduction <add>, %12, %cst_7 [1] : vector<8x32xf32> to vector<8xf32>
    %14 = vector.shape_cast %13 : vector<8xf32> to vector<8x1xf32>
    %cst_8 = arith.constant 3.200000e+01 : f32
    %15 = vector.broadcast %cst_8 : f32 to vector<8x1xf32>
    %16 = arith.divf %14, %15 : vector<8x1xf32>
    %17 = vector.broadcast %9 : vector<8x1xf32> to vector<8x32xf32>
    %18 = arith.subf %1, %17 : vector<8x32xf32>
    %cst_9 = arith.constant 9.99999974E-6 : f32
    %19 = vector.broadcast %cst_9 : f32 to vector<8x1xf32>
    %20 = arith.addf %16, %19 : vector<8x1xf32>
    %21 = math.rsqrt %20 : vector<8x1xf32>
    %22 = vector.broadcast %21 : vector<8x1xf32> to vector<8x32xf32>
    %23 = arith.mulf %18, %22 : vector<8x32xf32>
    %24 = vector.shape_cast %3 : vector<32xf32> to vector<1x32xf32>
    %25 = vector.broadcast %24 : vector<1x32xf32> to vector<8x32xf32>
    %26 = arith.mulf %23, %25 : vector<8x32xf32>
    %27 = vector.shape_cast %5 : vector<32xf32> to vector<1x32xf32>
    %28 = vector.broadcast %27 : vector<1x32xf32> to vector<8x32xf32>
    %29 = arith.addf %26, %28 : vector<8x32xf32>
    %30 = arith.truncf %29 : vector<8x32xf32> to vector<8x32xbf16>
    %c0_10 = arith.constant 0 : index
    %c0_11 = arith.constant 0 : index
    %31 = vector.load %arg5[%c0_10, %c0_11] : memref<32x96xbf16, #tpu.memory_space<vmem>>, vector<32x96xbf16>
    %cst_12 = arith.constant dense<0.000000e+00> : vector<8x96xf32>
    %32 = tpu.matmul %30, %31, %cst_12 {dimension_numbers = #tpu.dot_dimension_numbers<[1], [0], [0], [1], [0, 0, 1, 1], [], []>} : vector<8x32xbf16>, vector<32x96xbf16>, vector<8x96xf32> -> vector<8x96xf32>
    %c0_13 = arith.constant 0 : index
    %c0_14 = arith.constant 0 : index
    %33 = vector.load %arg6[%c0_13, %c0_14] : memref<1x96xf32, #tpu.memory_space<vmem>>, vector<1x96xf32>
    %34 = vector.shape_cast %33 : vector<1x96xf32> to vector<96xf32>
    %35 = vector.shape_cast %34 : vector<96xf32> to vector<1x96xf32>
    %36 = vector.broadcast %35 : vector<1x96xf32> to vector<8x96xf32>
    %37 = arith.addf %32, %36 : vector<8x96xf32>
    %38 = vector.extract_strided_slice %37 {offsets = [0, 0], sizes = [8, 8], strides = [1, 1]} : vector<8x96xf32> to vector<8x8xf32>
    %cst_15 = arith.constant 0.353553385 : f32
    %39 = vector.broadcast %cst_15 : f32 to vector<8x8xf32>
    %40 = arith.mulf %38, %39 : vector<8x8xf32>
    %41 = arith.truncf %40 : vector<8x8xf32> to vector<8x8xbf16>
    %c0_16 = arith.constant 0 : index
    %c0_17 = arith.constant 0 : index
    %c0_18 = arith.constant 0 : index
    %c0_19 = arith.constant 0 : index
    %42 = vector.load %arg7[%c0_16, %c0_17, %c0_18, %c0_19] : memref<1x4x8x8xbf16, #tpu.memory_space<vmem>>, vector<1x1x8x8xbf16>
    %43 = vector.shape_cast %42 : vector<1x1x8x8xbf16> to vector<8x8xbf16>
    %44 = vector.shape_cast %41 : vector<8x8xbf16> to vector<1x1x8x8xbf16>
    tpu.vector_store %arg7[%c0_16, %c0_17, %c0_18, %c0_19], %44 {strides = array<i32>} : memref<1x4x8x8xbf16, #tpu.memory_space<vmem>>, vector<1x1x8x8xbf16>,
    %45 = vector.extract_strided_slice %37 {offsets = [0, 32], sizes = [8, 8], strides = [1, 1]} : vector<8x96xf32> to vector<8x8xf32>
    %46 = arith.truncf %45 : vector<8x8xf32> to vector<8x8xbf16>
    %c0_20 = arith.constant 0 : index
    %c0_21 = arith.constant 0 : index
    %c0_22 = arith.constant 0 : index
    %c0_23 = arith.constant 0 : index
    %47 = vector.load %arg8[%c0_20, %c0_21, %c0_22, %c0_23] : memref<1x4x8x8xbf16, #tpu.memory_space<vmem>>, vector<1x1x8x8xbf16>
    %48 = vector.shape_cast %47 : vector<1x1x8x8xbf16> to vector<8x8xbf16>
    %49 = vector.shape_cast %46 : vector<8x8xbf16> to vector<1x1x8x8xbf16>
    tpu.vector_store %arg8[%c0_20, %c0_21, %c0_22, %c0_23], %49 {strides = array<i32>} : memref<1x4x8x8xbf16, #tpu.memory_space<vmem>>, vector<1x1x8x8xbf16>,
    %50 = vector.extract_strided_slice %37 {offsets = [0, 64], sizes = [8, 8], strides = [1, 1]} : vector<8x96xf32> to vector<8x8xf32>
    %51 = arith.truncf %50 : vector<8x8xf32> to vector<8x8xbf16>
    %c0_24 = arith.constant 0 : index
    %c0_25 = arith.constant 0 : index
    %c0_26 = arith.constant 0 : index
    %c0_27 = arith.constant 0 : index
    %52 = vector.load %arg9[%c0_24, %c0_25, %c0_26, %c0_27] : memref<1x4x8x8xbf16, #tpu.memory_space<vmem>>, vector<1x1x8x8xbf16>
    %53 = vector.shape_cast %52 : vector<1x1x8x8xbf16> to vector<8x8xbf16>
    %54 = vector.shape_cast %51 : vector<8x8xbf16> to vector<1x1x8x8xbf16>
    tpu.vector_store %arg9[%c0_24, %c0_25, %c0_26, %c0_27], %54 {strides = array<i32>} : memref<1x4x8x8xbf16, #tpu.memory_space<vmem>>, vector<1x1x8x8xbf16>,
    %55 = vector.extract_strided_slice %37 {offsets = [0, 8], sizes = [8, 8], strides = [1, 1]} : vector<8x96xf32> to vector<8x8xf32>
    %cst_28 = arith.constant 0.353553385 : f32
    %56 = vector.broadcast %cst_28 : f32 to vector<8x8xf32>
    %57 = arith.mulf %55, %56 : vector<8x8xf32>
    %58 = arith.truncf %57 : vector<8x8xf32> to vector<8x8xbf16>
    %c0_29 = arith.constant 0 : index
    %c1 = arith.constant 1 : index
    %c0_30 = arith.constant 0 : index
    %c0_31 = arith.constant 0 : index
    %59 = vector.load %arg7[%c0_29, %c1, %c0_30, %c0_31] : memref<1x4x8x8xbf16, #tpu.memory_space<vmem>>, vector<1x1x8x8xbf16>
    %60 = vector.shape_cast %59 : vector<1x1x8x8xbf16> to vector<8x8xbf16>
    %61 = vector.shape_cast %58 : vector<8x8xbf16> to vector<1x1x8x8xbf16>
    tpu.vector_store %arg7[%c0_29, %c1, %c0_30, %c0_31], %61 {strides = array<i32>} : memref<1x4x8x8xbf16, #tpu.memory_space<vmem>>, vector<1x1x8x8xbf16>,
    %62 = vector.extract_strided_slice %37 {offsets = [0, 40], sizes = [8, 8], strides = [1, 1]} : vector<8x96xf32> to vector<8x8xf32>
    %63 = arith.truncf %62 : vector<8x8xf32> to vector<8x8xbf16>
    %c0_32 = arith.constant 0 : index
    %c1_33 = arith.constant 1 : index
    %c0_34 = arith.constant 0 : index
    %c0_35 = arith.constant 0 : index
    %64 = vector.load %arg8[%c0_32, %c1_33, %c0_34, %c0_35] : memref<1x4x8x8xbf16, #tpu.memory_space<vmem>>, vector<1x1x8x8xbf16>
    %65 = vector.shape_cast %64 : vector<1x1x8x8xbf16> to vector<8x8xbf16>
    %66 = vector.shape_cast %63 : vector<8x8xbf16> to vector<1x1x8x8xbf16>
    tpu.vector_store %arg8[%c0_32, %c1_33, %c0_34, %c0_35], %66 {strides = array<i32>} : memref<1x4x8x8xbf16, #tpu.memory_space<vmem>>, vector<1x1x8x8xbf16>,
    %67 = vector.extract_strided_slice %37 {offsets = [0, 72], sizes = [8, 8], strides = [1, 1]} : vector<8x96xf32> to vector<8x8xf32>
    %68 = arith.truncf %67 : vector<8x8xf32> to vector<8x8xbf16>
    %c0_36 = arith.constant 0 : index
    %c1_37 = arith.constant 1 : index
    %c0_38 = arith.constant 0 : index
    %c0_39 = arith.constant 0 : index
    %69 = vector.load %arg9[%c0_36, %c1_37, %c0_38, %c0_39] : memref<1x4x8x8xbf16, #tpu.memory_space<vmem>>, vector<1x1x8x8xbf16>
    %70 = vector.shape_cast %69 : vector<1x1x8x8xbf16> to vector<8x8xbf16>
    %71 = vector.shape_cast %68 : vector<8x8xbf16> to vector<1x1x8x8xbf16>
    tpu.vector_store %arg9[%c0_36, %c1_37, %c0_38, %c0_39], %71 {strides = array<i32>} : memref<1x4x8x8xbf16, #tpu.memory_space<vmem>>, vector<1x1x8x8xbf16>,
    %72 = vector.extract_strided_slice %37 {offsets = [0, 16], sizes = [8, 8], strides = [1, 1]} : vector<8x96xf32> to vector<8x8xf32>
    %cst_40 = arith.constant 0.353553385 : f32
    %73 = vector.broadcast %cst_40 : f32 to vector<8x8xf32>
    %74 = arith.mulf %72, %73 : vector<8x8xf32>
    %75 = arith.truncf %74 : vector<8x8xf32> to vector<8x8xbf16>
    %c0_41 = arith.constant 0 : index
    %c2 = arith.constant 2 : index
    %c0_42 = arith.constant 0 : index
    %c0_43 = arith.constant 0 : index
    %76 = vector.load %arg7[%c0_41, %c2, %c0_42, %c0_43] : memref<1x4x8x8xbf16, #tpu.memory_space<vmem>>, vector<1x1x8x8xbf16>
    %77 = vector.shape_cast %76 : vector<1x1x8x8xbf16> to vector<8x8xbf16>
    %78 = vector.shape_cast %75 : vector<8x8xbf16> to vector<1x1x8x8xbf16>
    tpu.vector_store %arg7[%c0_41, %c2, %c0_42, %c0_43], %78 {strides = array<i32>} : memref<1x4x8x8xbf16, #tpu.memory_space<vmem>>, vector<1x1x8x8xbf16>,
    %79 = vector.extract_strided_slice %37 {offsets = [0, 48], sizes = [8, 8], strides = [1, 1]} : vector<8x96xf32> to vector<8x8xf32>
    %80 = arith.truncf %79 : vector<8x8xf32> to vector<8x8xbf16>
    %c0_44 = arith.constant 0 : index
    %c2_45 = arith.constant 2 : index
    %c0_46 = arith.constant 0 : index
    %c0_47 = arith.constant 0 : index
    %81 = vector.load %arg8[%c0_44, %c2_45, %c0_46, %c0_47] : memref<1x4x8x8xbf16, #tpu.memory_space<vmem>>, vector<1x1x8x8xbf16>
    %82 = vector.shape_cast %81 : vector<1x1x8x8xbf16> to vector<8x8xbf16>
    %83 = vector.shape_cast %80 : vector<8x8xbf16> to vector<1x1x8x8xbf16>
    tpu.vector_store %arg8[%c0_44, %c2_45, %c0_46, %c0_47], %83 {strides = array<i32>} : memref<1x4x8x8xbf16, #tpu.memory_space<vmem>>, vector<1x1x8x8xbf16>,
    %84 = vector.extract_strided_slice %37 {offsets = [0, 80], sizes = [8, 8], strides = [1, 1]} : vector<8x96xf32> to vector<8x8xf32>
    %85 = arith.truncf %84 : vector<8x8xf32> to vector<8x8xbf16>
    %c0_48 = arith.constant 0 : index
    %c2_49 = arith.constant 2 : index
    %c0_50 = arith.constant 0 : index
    %c0_51 = arith.constant 0 : index
    %86 = vector.load %arg9[%c0_48, %c2_49, %c0_50, %c0_51] : memref<1x4x8x8xbf16, #tpu.memory_space<vmem>>, vector<1x1x8x8xbf16>
    %87 = vector.shape_cast %86 : vector<1x1x8x8xbf16> to vector<8x8xbf16>
    %88 = vector.shape_cast %85 : vector<8x8xbf16> to vector<1x1x8x8xbf16>
    tpu.vector_store %arg9[%c0_48, %c2_49, %c0_50, %c0_51], %88 {strides = array<i32>} : memref<1x4x8x8xbf16, #tpu.memory_space<vmem>>, vector<1x1x8x8xbf16>,
    %89 = vector.extract_strided_slice %37 {offsets = [0, 24], sizes = [8, 8], strides = [1, 1]} : vector<8x96xf32> to vector<8x8xf32>
    %cst_52 = arith.constant 0.353553385 : f32
    %90 = vector.broadcast %cst_52 : f32 to vector<8x8xf32>
    %91 = arith.mulf %89, %90 : vector<8x8xf32>
    %92 = arith.truncf %91 : vector<8x8xf32> to vector<8x8xbf16>
    %c0_53 = arith.constant 0 : index
    %c3 = arith.constant 3 : index
    %c0_54 = arith.constant 0 : index
    %c0_55 = arith.constant 0 : index
    %93 = vector.load %arg7[%c0_53, %c3, %c0_54, %c0_55] : memref<1x4x8x8xbf16, #tpu.memory_space<vmem>>, vector<1x1x8x8xbf16>
    %94 = vector.shape_cast %93 : vector<1x1x8x8xbf16> to vector<8x8xbf16>
    %95 = vector.shape_cast %92 : vector<8x8xbf16> to vector<1x1x8x8xbf16>
    tpu.vector_store %arg7[%c0_53, %c3, %c0_54, %c0_55], %95 {strides = array<i32>} : memref<1x4x8x8xbf16, #tpu.memory_space<vmem>>, vector<1x1x8x8xbf16>,
    %96 = vector.extract_strided_slice %37 {offsets = [0, 56], sizes = [8, 8], strides = [1, 1]} : vector<8x96xf32> to vector<8x8xf32>
    %97 = arith.truncf %96 : vector<8x8xf32> to vector<8x8xbf16>
    %c0_56 = arith.constant 0 : index
    %c3_57 = arith.constant 3 : index
    %c0_58 = arith.constant 0 : index
    %c0_59 = arith.constant 0 : index
    %98 = vector.load %arg8[%c0_56, %c3_57, %c0_58, %c0_59] : memref<1x4x8x8xbf16, #tpu.memory_space<vmem>>, vector<1x1x8x8xbf16>
    %99 = vector.shape_cast %98 : vector<1x1x8x8xbf16> to vector<8x8xbf16>
    %100 = vector.shape_cast %97 : vector<8x8xbf16> to vector<1x1x8x8xbf16>
    tpu.vector_store %arg8[%c0_56, %c3_57, %c0_58, %c0_59], %100 {strides = array<i32>} : memref<1x4x8x8xbf16, #tpu.memory_space<vmem>>, vector<1x1x8x8xbf16>,
    %101 = vector.extract_strided_slice %37 {offsets = [0, 88], sizes = [8, 8], strides = [1, 1]} : vector<8x96xf32> to vector<8x8xf32>
    %102 = arith.truncf %101 : vector<8x8xf32> to vector<8x8xbf16>
    %c0_60 = arith.constant 0 : index
    %c3_61 = arith.constant 3 : index
    %c0_62 = arith.constant 0 : index
    %c0_63 = arith.constant 0 : index
    %103 = vector.load %arg9[%c0_60, %c3_61, %c0_62, %c0_63] : memref<1x4x8x8xbf16, #tpu.memory_space<vmem>>, vector<1x1x8x8xbf16>
    %104 = vector.shape_cast %103 : vector<1x1x8x8xbf16> to vector<8x8xbf16>
    %105 = vector.shape_cast %102 : vector<8x8xbf16> to vector<1x1x8x8xbf16>
    tpu.vector_store %arg9[%c0_60, %c3_61, %c0_62, %c0_63], %105 {strides = array<i32>} : memref<1x4x8x8xbf16, #tpu.memory_space<vmem>>, vector<1x1x8x8xbf16>,
    return
  }
  func.func @transform_0(%arg0: i32, %arg1: i32) -> (i32, i32, i32) {
    %c0_i32 = arith.constant 0 : i32
    %c0_i32_0 = arith.constant 0 : i32
    return %arg0, %arg1, %c0_i32 : i32, i32, i32
  }
  func.func @transform_1(%arg0: i32, %arg1: i32) -> (i32, i32) {
    %c0_i32 = arith.constant 0 : i32
    %c0_i32_0 = arith.constant 0 : i32
    %c0_i32_1 = arith.constant 0 : i32
    return %c0_i32, %c0_i32_0 : i32, i32
  }
  func.func @transform_2(%arg0: i32, %arg1: i32) -> (i32, i32) {
    %c0_i32 = arith.constant 0 : i32
    %c0_i32_0 = arith.constant 0 : i32
    %c0_i32_1 = arith.constant 0 : i32
    return %c0_i32, %c0_i32_0 : i32, i32
  }
  func.func @transform_3(%arg0: i32, %arg1: i32) -> (i32, i32) {
    %c0_i32 = arith.constant 0 : i32
    %c0_i32_0 = arith.constant 0 : i32
    %c0_i32_1 = arith.constant 0 : i32
    return %c0_i32, %c0_i32_0 : i32, i32
  }
  func.func @transform_4(%arg0: i32, %arg1: i32) -> (i32, i32) {
    %c0_i32 = arith.constant 0 : i32
    %c0_i32_0 = arith.constant 0 : i32
    %c0_i32_1 = arith.constant 0 : i32
    return %c0_i32, %c0_i32_0 : i32, i32
  }
  func.func @transform_5(%arg0: i32, %arg1: i32) -> (i32, i32, i32, i32) {
    %c0_i32 = arith.constant 0 : i32
    %c0_i32_0 = arith.constant 0 : i32
    %c0_i32_1 = arith.constant 0 : i32
    return %arg0, %c0_i32, %arg1, %c0_i32_0 : i32, i32, i32, i32
  }
  func.func @transform_6(%arg0: i32, %arg1: i32) -> (i32, i32, i32, i32) {
    %c0_i32 = arith.constant 0 : i32
    %c0_i32_0 = arith.constant 0 : i32
    %c0_i32_1 = arith.constant 0 : i32
    return %arg0, %c0_i32, %arg1, %c0_i32_0 : i32, i32, i32, i32
  }
  func.func @transform_7(%arg0: i32, %arg1: i32) -> (i32, i32, i32, i32) {
    %c0_i32 = arith.constant 0 : i32
    %c0_i32_0 = arith.constant 0 : i32
    %c0_i32_1 = arith.constant 0 : i32
    return %arg0, %c0_i32, %arg1, %c0_i32_0 : i32, i32, i32, i32
  }
}

</mosaic_0001>

<llo_original>
// kernel: tpu_custom_call.1
$region0: #{tpu_custom_call.1}
  #allocation0 [shape = 'u32[]', space=smem, size = 0x4, offset = 0x4, fixed_abs, tag = 'smem constant byte address 0x4 - core index']
  #allocation1 [shape = 'u32[144,128]{1,0:T(1,128)}', space=vmem, size = 0x12000, scoped, tag = 'internal scratch']
  %s0 = inlined_call_operand.hbm [shape: f32[2,8,32], index: 0, kind: input, shape index: {}]
  %s1 = inlined_call_operand.vmem [shape: f32[1,32], index: 1, kind: input, shape index: {}]
  %s2 = inlined_call_operand.vmem [shape: f32[1,32], index: 2, kind: input, shape index: {}]
  %s3 = inlined_call_operand.hbm [shape: bf16[32,96], index: 3, kind: input, shape index: {}]
  %s4 = inlined_call_operand.vmem [shape: f32[1,96], index: 4, kind: input, shape index: {}]
  %s5 = inlined_call_operand.hbm [shape: bf16[2,4,8,8], index: 5, kind: output, shape index: {0}]
  %s6 = inlined_call_operand.hbm [shape: bf16[2,4,8,8], index: 6, kind: output, shape index: {1}]
  %s7 = inlined_call_operand.hbm [shape: bf16[2,4,8,8], index: 7, kind: output, shape index: {2}]
  %8 = xla_tuple %s5, %s6, %s7
  %s9 = sld [smem:[#allocation0]]
  $region77: #{tpu_custom_call.1} parent=0
    _
  %s11 = ssub.s32 1, %s9
  %s12 = scalar_select 0, %s11, %s9
  $region1: #{tpu_custom_call.1} parent=0
    #allocation2 [shape = 'u8[8192]{0}', space=vmem, size = 0x2000, scoped, tag = 'input window, operand 0']
    #allocation3 [shape = 's32[2]{0}', space=sflag, size = 0x8, scoped, tag = 'scoped memory for tpu_custom_call.1']
    #allocation4 [shape = 's32[2]{0}', space=sflag, size = 0x8, scoped, tag = 'scoped memory for tpu_custom_call.1']
    #allocation5 [shape = 'u8[8192]{0}', space=vmem, size = 0x2000, scoped, tag = 'input window, operand 3, single buffered']
    #allocation6 [shape = 's32[1]{0}', space=sflag, size = 0x4, scoped, tag = 'scoped memory for tpu_custom_call.1']
    #allocation7 [shape = 'u8[16384]{0}', space=vmem, size = 0x4000, scoped, tag = 'output window, operand 0']
    #allocation8 [shape = 'u8[16384]{0}', space=vmem, size = 0x4000, scoped, tag = 'output window, operand 1']
    #allocation9 [shape = 's32[2]{0}', space=sflag, size = 0x8, scoped, tag = 'scoped memory for tpu_custom_call.1']
    #allocation10 [shape = 'u8[16384]{0}', space=vmem, size = 0x4000, scoped, tag = 'output window, operand 2']
    %13 = vsyncpa [#allocation3], 0
    %s14 = scalar_lea.sflag [#allocation3], 1
    %15 = vsyncpa %s14, 0
    %16 = vsyncpa [#allocation6], 0
    %17 = vsyncpa [#allocation4], 0
    %s18 = scalar_lea.sflag [#allocation4], 1
    %19 = vsyncpa %s18, 0
    %20 = vsyncpa [#allocation9], 0
    %s21 = scalar_lea.sflag [#allocation9], 1
    %22 = vsyncpa %s21, 0
    loop: start=0, step=1, limit=4
    $region2: #{tpu_custom_call.1} parent=1 // loop_pre_header
      _
    $region3: #{tpu_custom_call.1} parent=1 // loop_header
      %s24 = sphi 0, %s28
      %p25 = scmp.ge.s32.totalorder %s24, 4
      %s31 = sphi 0, %s43
      %s32 = sphi 0, %s39
      %s33 = sphi 0, %s31
      %s34 = sphi 0, %s32
      %s35 = sphi 0, %s33
      %s36 = sphi 0, %s34
      %s48 = sphi 0, %s50
      %s51 = sphi 0, %s48
      %s52 = sphi 0, %s51
      %s68 = sphi 0, %s52
      %s72 = sphi 0, %s72
      %s74 = sphi 0, %s72
      %s75 = sphi 0, %s74
      %s89 = sphi 0, %s75
      %s93 = sphi 0, %s93
      %s95 = sphi 0, %s93
      %s96 = sphi 0, %s95
      %s110 = sphi 0, %s96
      %s114 = sphi 0, %s114
      %s116 = sphi 0, %s114
      %s117 = sphi 0, %s116
      %s131 = sphi 0, %s117
      %s135 = sphi 0, %s135
      %s137 = sphi 0, %s135
      %s138 = sphi 0, %s137
      %s152 = sphi 0, %s138
      %s160 = sphi 0, %s162
      %s163 = sphi 0, %s160
      %s164 = sphi 0, %s163
      %s180 = sphi 0, %s164
      %s188 = sphi 0, %s190
      %s191 = sphi 0, %s188
      %s192 = sphi 0, %s191
      %s208 = sphi 0, %s192
      %s216 = sphi 0, %s218
      %s219 = sphi 0, %s216
      %s220 = sphi 0, %s219
      %s236 = sphi 0, %s220
    $region4: #{tpu_custom_call.1} parent=1 // loop_header_branch
      %27 = sbr.rel (%p25) target = $region8
    $region5: #{tpu_custom_call.1} parent=1 // loop_body
      %s29 = ssub.s32 %s24, 1
      %s30 = ssub.s32 %s24, 2
      %s37 = sadd.s32 1, %s32
      %p38 = scmp.ge.s32.totalorder %s37, 1
      %s39 = scalar_select %p38, 0, %s37
      %s40 = sadd.s32 1, %s31
      %s41 = scalar_select %p38, %s40, %s31
      %p42 = scmp.ge.s32.totalorder %s41, 2
      %s43 = scalar_select %p42, 0, %s41
      %s44 = ssub.s32 %s31, %s43
      %s45 = ssub.s32 %s32, %s39
      %s46 = sor.u32 %s44, %s45
      %p47 = scmp.eq.s32.totalorder %s46, 0
      %s49 = sadd.s32 %s48, 1
      %s50 = scalar_select %p47, %s48, %s49
      %p53 = pneg %p47
      %p54 = scmp.eq.s32.totalorder %s24, 1
      %p55 = por %p53, %p54
      %p56 = scmp.ne.s32.totalorder %s48, %s51
      %p57 = scmp.eq.s32.totalorder %s24, 0
      %p58 = por %p56, %p57
      %p59 = scmp.ne.s32.totalorder %s48, %s51
      %p60 = scmp.eq.s32.totalorder %s29, 1
      %p61 = por %p59, %p60
      %p62 = scmp.ne.s32.totalorder %s51, %s52
      %p63 = scmp.eq.s32.totalorder %s29, 0
      %p64 = por %p62, %p63
      %p65 = scmp.ne.s32.totalorder %s51, %s52
      %p66 = scmp.eq.s32.totalorder %s30, 1
      %p67 = por %p65, %p66
      %p69 = scmp.ne.s32.totalorder %s52, %s68
      %p70 = scmp.eq.s32.totalorder %s30, 0
      %p71 = por %p69, %p70
      %s73 = sadd.s32 %s72, 1
      %p76 = scmp.eq.s32.totalorder %s24, 1
      %p77 = scmp.ne.s32.totalorder %s72, %s74
      %p78 = scmp.eq.s32.totalorder %s24, 0
      %p79 = por %p77, %p78
      %p80 = scmp.ne.s32.totalorder %s72, %s74
      %p81 = scmp.eq.s32.totalorder %s29, 1
      %p82 = por %p80, %p81
      %p83 = scmp.ne.s32.totalorder %s74, %s75
      %p84 = scmp.eq.s32.totalorder %s29, 0
      %p85 = por %p83, %p84
      %p86 = scmp.ne.s32.totalorder %s74, %s75
      %p87 = scmp.eq.s32.totalorder %s30, 1
      %p88 = por %p86, %p87
      %p90 = scmp.ne.s32.totalorder %s75, %s89
      %p91 = scmp.eq.s32.totalorder %s30, 0
      %p92 = por %p90, %p91
      %s94 = sadd.s32 %s93, 1
      %p97 = scmp.eq.s32.totalorder %s24, 1
      %p98 = scmp.ne.s32.totalorder %s93, %s95
      %p99 = scmp.eq.s32.totalorder %s24, 0
      %p100 = por %p98, %p99
      %p101 = scmp.ne.s32.totalorder %s93, %s95
      %p102 = scmp.eq.s32.totalorder %s29, 1
      %p103 = por %p101, %p102
      %p104 = scmp.ne.s32.totalorder %s95, %s96
      %p105 = scmp.eq.s32.totalorder %s29, 0
      %p106 = por %p104, %p105
      %p107 = scmp.ne.s32.totalorder %s95, %s96
      %p108 = scmp.eq.s32.totalorder %s30, 1
      %p109 = por %p107, %p108
      %p111 = scmp.ne.s32.totalorder %s96, %s110
      %p112 = scmp.eq.s32.totalorder %s30, 0
      %p113 = por %p111, %p112
      %s115 = sadd.s32 %s114, 1
      %p118 = scmp.eq.s32.totalorder %s24, 1
      %p119 = scmp.ne.s32.totalorder %s114, %s116
      %p120 = scmp.eq.s32.totalorder %s24, 0
      %p121 = por %p119, %p120
      %p122 = scmp.ne.s32.totalorder %s114, %s116
      %p123 = scmp.eq.s32.totalorder %s29, 1
      %p124 = por %p122, %p123
      %p125 = scmp.ne.s32.totalorder %s116, %s117
      %p126 = scmp.eq.s32.totalorder %s29, 0
      %p127 = por %p125, %p126
      %p128 = scmp.ne.s32.totalorder %s116, %s117
      %p129 = scmp.eq.s32.totalorder %s30, 1
      %p130 = por %p128, %p129
      %p132 = scmp.ne.s32.totalorder %s117, %s131
      %p133 = scmp.eq.s32.totalorder %s30, 0
      %p134 = por %p132, %p133
      %s136 = sadd.s32 %s135, 1
      %p139 = scmp.eq.s32.totalorder %s24, 1
      %p140 = scmp.ne.s32.totalorder %s135, %s137
      %p141 = scmp.eq.s32.totalorder %s24, 0
      %p142 = por %p140, %p141
      %p143 = scmp.ne.s32.totalorder %s135, %s137
      %p144 = scmp.eq.s32.totalorder %s29, 1
      %p145 = por %p143, %p144
      %p146 = scmp.ne.s32.totalorder %s137, %s138
      %p147 = scmp.eq.s32.totalorder %s29, 0
      %p148 = por %p146, %p147
      %p149 = scmp.ne.s32.totalorder %s137, %s138
      %p150 = scmp.eq.s32.totalorder %s30, 1
      %p151 = por %p149, %p150
      %p153 = scmp.ne.s32.totalorder %s138, %s152
      %p154 = scmp.eq.s32.totalorder %s30, 0
      %p155 = por %p153, %p154
      %s156 = ssub.s32 %s31, %s43
      %s157 = ssub.s32 %s32, %s39
      %s158 = sor.u32 %s156, %s157
      %p159 = scmp.eq.s32.totalorder %s158, 0
      %s161 = sadd.s32 %s160, 1
      %s162 = scalar_select %p159, %s160, %s161
      %p165 = pneg %p159
      %p166 = scmp.eq.s32.totalorder %s24, 1
      %p167 = por %p165, %p166
      %p168 = scmp.ne.s32.totalorder %s160, %s163
      %p169 = scmp.eq.s32.totalorder %s24, 0
      %p170 = por %p168, %p169
      %p171 = scmp.ne.s32.totalorder %s160, %s163
      %p172 = scmp.eq.s32.totalorder %s29, 1
      %p173 = por %p171, %p172
      %p174 = scmp.ne.s32.totalorder %s163, %s164
      %p175 = scmp.eq.s32.totalorder %s29, 0
      %p176 = por %p174, %p175
      %p177 = scmp.ne.s32.totalorder %s163, %s164
      %p178 = scmp.eq.s32.totalorder %s30, 1
      %p179 = por %p177, %p178
      %p181 = scmp.ne.s32.totalorder %s164, %s180
      %p182 = scmp.eq.s32.totalorder %s30, 0
      %p183 = por %p181, %p182
      %s184 = ssub.s32 %s31, %s43
      %s185 = ssub.s32 %s32, %s39
      %s186 = sor.u32 %s184, %s185
      %p187 = scmp.eq.s32.totalorder %s186, 0
      %s189 = sadd.s32 %s188, 1
      %s190 = scalar_select %p187, %s188, %s189
      %p193 = pneg %p187
      %p194 = scmp.eq.s32.totalorder %s24, 1
      %p195 = por %p193, %p194
      %p196 = scmp.ne.s32.totalorder %s188, %s191
      %p197 = scmp.eq.s32.totalorder %s24, 0
      %p198 = por %p196, %p197
      %p199 = scmp.ne.s32.totalorder %s188, %s191
      %p200 = scmp.eq.s32.totalorder %s29, 1
      %p201 = por %p199, %p200
      %p202 = scmp.ne.s32.totalorder %s191, %s192
      %p203 = scmp.eq.s32.totalorder %s29, 0
      %p204 = por %p202, %p203
      %p205 = scmp.ne.s32.totalorder %s191, %s192
      %p206 = scmp.eq.s32.totalorder %s30, 1
      %p207 = por %p205, %p206
      %p209 = scmp.ne.s32.totalorder %s192, %s208
      %p210 = scmp.eq.s32.totalorder %s30, 0
      %p211 = por %p209, %p210
      %s212 = ssub.s32 %s31, %s43
      %s213 = ssub.s32 %s32, %s39
      %s214 = sor.u32 %s212, %s213
      %p215 = scmp.eq.s32.totalorder %s214, 0
      %s217 = sadd.s32 %s216, 1
      %s218 = scalar_select %p215, %s216, %s217
      %p221 = pneg %p215
      %p222 = scmp.eq.s32.totalorder %s24, 1
      %p223 = por %p221, %p222
      %p224 = scmp.ne.s32.totalorder %s216, %s219
      %p225 = scmp.eq.s32.totalorder %s24, 0
      %p226 = por %p224, %p225
      %p227 = scmp.ne.s32.totalorder %s216, %s219
      %p228 = scmp.eq.s32.totalorder %s29, 1
      %p229 = por %p227, %p228
      %p230 = scmp.ne.s32.totalorder %s219, %s220
      %p231 = scmp.eq.s32.totalorder %s29, 0
      %p232 = por %p230, %p231
      %p233 = scmp.ne.s32.totalorder %s219, %s220
      %p234 = scmp.eq.s32.totalorder %s30, 1
      %p235 = por %p233, %p234
      %p237 = scmp.ne.s32.totalorder %s220, %s236
      %p238 = scmp.eq.s32.totalorder %s30, 0
      %p239 = por %p237, %p238
      %p240 = scmp.le.s32.totalorder 1, %s24
      %p241 = scmp.lt.s32.totalorder %s24, 3
      %p242 = pnand %p240, %p241
      %p243 = pneg %p242
      // Predicated region
      $region9: #{tpu_custom_call.1} parent=5 // pred_check
        _
      $region10: #{tpu_custom_call.1} parent=5 // pred_check_branch
        %245 = sbr.rel (%p242) target = $region12
      $region11: #{tpu_custom_call.1} parent=5 // pred_region
        %s246 = ssub.s32 %s24, 1
        // Predicated region
        $region13: #{tpu_custom_call.1} parent=11 // pred_check
          %p247 = pneg %p85
        $region14: #{tpu_custom_call.1} parent=11 // pred_check_branch
          %249 = sbr.rel (%p247) target = $region16
        $region15: #{tpu_custom_call.1} parent=11 // pred_region
          _
        $region16: #{tpu_custom_call.1} parent=11 // pred_fallthru
          _
        // Predicated region
        $region17: #{tpu_custom_call.1} parent=11 // pred_check
          %p250 = pneg %p106
        $region18: #{tpu_custom_call.1} parent=11 // pred_check_branch
          %252 = sbr.rel (%p250) target = $region20
        $region19: #{tpu_custom_call.1} parent=11 // pred_region
          _
        $region20: #{tpu_custom_call.1} parent=11 // pred_fallthru
          _
        // Predicated region
        $region21: #{tpu_custom_call.1} parent=11 // pred_check
          %p253 = pneg %p127
        $region22: #{tpu_custom_call.1} parent=11 // pred_check_branch
          %255 = sbr.rel (%p253) target = $region24
        $region23: #{tpu_custom_call.1} parent=11 // pred_region
          %s257 = ssub.s32 256, 256
          %258 = vsyncadd [#allocation6], %s257
          %s259 = sshll.u32 [#allocation5], 4
          %s260 = int_to_ptr.vmem [resolvable:$true] %s259
          %265 = dma.hbm_to_vmem [thread:$0]  %s3, 256, %s260, [#allocation6], 64, 64, 4
        $region24: #{tpu_custom_call.1} parent=11 // pred_fallthru
          _
        // Predicated region
        $region25: #{tpu_custom_call.1} parent=11 // pred_check
          %p266 = pneg %p148
        $region26: #{tpu_custom_call.1} parent=11 // pred_check_branch
          %268 = sbr.rel (%p266) target = $region28
        $region27: #{tpu_custom_call.1} parent=11 // pred_region
          _
        $region28: #{tpu_custom_call.1} parent=11 // pred_fallthru
          _
      $region12: #{tpu_custom_call.1} parent=5 // pred_fallthru
        _
      %p269 = scmp.lt.s32.totalorder %s24, 2
      // Predicated region
      $region29: #{tpu_custom_call.1} parent=5 // pred_check
        %p270 = pneg %p269
      $region30: #{tpu_custom_call.1} parent=5 // pred_check_branch
        %272 = sbr.rel (%p270) target = $region32
      $region31: #{tpu_custom_call.1} parent=5 // pred_region
        // Predicated region
        $region33: #{tpu_custom_call.1} parent=31 // pred_check
          %p273 = pneg %p58
        $region34: #{tpu_custom_call.1} parent=31 // pred_check_branch
          %275 = sbr.rel (%p273) target = $region36
        $region35: #{tpu_custom_call.1} parent=31 // pred_region
          %s276 = sand.u32 %s48, 1
          %s277 = scalar_lea.sflag [#allocation3], %s276
          %s278 = sand.u32 %s48, 1
          %s279 = smul.addr %s278, 8
          %s280 = scalar_lea.vmem [#allocation2], %s279
          %s282 = ssub.s32 128, 128
          %283 = vsyncadd %s277, %s282
          %s284 = sadd.s32 %s32, %s31
          %s285 = smul.addr %s284, 128
          %s286 = scalar_lea.hbm %s0, %s285
          %s288 = sshll.u32 %s280, 4
          %s289 = int_to_ptr.vmem [resolvable:$true] %s288
          %291 = dma.hbm_to_vmem [thread:$0]  %s286, 128, %s289, %s277
        $region36: #{tpu_custom_call.1} parent=31 // pred_fallthru
          _
      $region32: #{tpu_custom_call.1} parent=5 // pred_fallthru
        _
      %p292 = scmp.le.s32.totalorder 1, %s24
      %p293 = scmp.lt.s32.totalorder %s24, 3
      %p294 = pnand %p292, %p293
      %p295 = pneg %p294
      // Predicated region
      $region37: #{tpu_custom_call.1} parent=5 // pred_check
        _
      $region38: #{tpu_custom_call.1} parent=5 // pred_check_branch
        %297 = sbr.rel (%p294) target = $region40
      $region39: #{tpu_custom_call.1} parent=5 // pred_region
        %s298 = ssub.s32 %s24, 1
        %s299 = sand.u32 %s51, 1
        %s300 = scalar_lea.sflag [#allocation3], %s299
        %s301 = sand.u32 %s51, 1
        %s302 = smul.addr %s301, 8
        %s303 = scalar_lea.vmem [#allocation2], %s302
        // Predicated region
        $region41: #{tpu_custom_call.1} parent=39 // pred_check
          %p304 = pneg %p64
        $region42: #{tpu_custom_call.1} parent=39 // pred_check_branch
          %306 = sbr.rel (%p304) target = $region44
        $region43: #{tpu_custom_call.1} parent=39 // pred_region
          %307 = dma.done %s300, 128
        $region44: #{tpu_custom_call.1} parent=39 // pred_fallthru
          _
        // Predicated region
        $region45: #{tpu_custom_call.1} parent=39 // pred_check
          %p308 = pneg %p127
        $region46: #{tpu_custom_call.1} parent=39 // pred_check_branch
          %310 = sbr.rel (%p308) target = $region48
        $region47: #{tpu_custom_call.1} parent=39 // pred_region
          %311 = dma.done [#allocation6], 256
        $region48: #{tpu_custom_call.1} parent=39 // pred_fallthru
          _
        %s312 = sand.u32 %s51, 1
        %s313 = scalar_lea.sflag [#allocation3], %s312
        %s314 = sand.u32 %s51, 1
        %s315 = smul.addr %s314, 8
        %s316 = scalar_lea.vmem [#allocation2], %s315
        %p317 = pneg %p64
        %p318 = pneg %p61
        %p319 = pneg %p85
        %p320 = pneg %p82
        %p321 = pneg %p106
        %p322 = pneg %p103
        %p323 = pneg %p127
        %p324 = pneg %p124
        %p325 = pneg %p148
        %p326 = pneg %p145
        %p327 = pneg %p176
        %p328 = pneg %p173
        %s329 = sand.u32 %s163, 1
        %s330 = scalar_lea.sflag [#allocation4], %s329
        %s331 = sand.u32 %s163, 1
        %s332 = smul.addr %s331, 16
        %s333 = scalar_lea.vmem [#allocation7], %s332
        %p334 = pneg %p204
        %p335 = pneg %p201
        %s336 = sand.u32 %s29, 1
        %s337 = scalar_lea.sflag [#allocation9], %s336
        %s338 = sand.u32 %s191, 1
        %s339 = smul.addr %s338, 16
        %s340 = scalar_lea.vmem [#allocation8], %s339
        %p341 = pneg %p232
        %p342 = pneg %p229
        %s343 = sand.u32 %s29, 1
        %s344 = scalar_lea.sflag [#allocation9], %s343
        %s345 = sand.u32 %s219, 1
        %s346 = smul.addr %s345, 16
        %s347 = scalar_lea.vmem [#allocation10], %s346
        %v349 = vld [vmem:[%s303] sm:$0xff]
        %v350 = vld [vmem:[%s1] sm:$0x1]
        %v351 = vld [vmem:[%s2] sm:$0x1]
        %vm352 = vcmask 261120
        %v353 = vsel %vm352, %v349, 0.0
        %354 = vadd.xlane.f32.xlu0 %v353
        %v355 = vpop.xlane.xlu0 %354
        %v356 = vrcp.pop 32.0
        %v357 = vmul.f32 %v355, %v356
        %v358 = vsub.f32 %v349, %v357
        %v359 = vmul.f32 %v358, %v358
        %v360 = vsel %vm352, %v359, 0.0
        %361 = vadd.xlane.f32.xlu0 %v360
        %v362 = vpop.xlane.xlu0 %361
        %v363 = vmul.f32 %v362, %v356
        %v364 = vadd.f32 %v363, 1e-05
        %v365 = vrsqrt.pop %v364
        %v366 = vmul.f32 %v358, %v365
        %v368 = vlaneseq
        %v369 = vshrl.u32 %v368, 7
        %v370 = vsub.s32 0, %v369
        %v371 = vrot.slane %v350, %v370
        %v373 = vmul.f32 %v366, %v371
        %v375 = vlaneseq
        %v376 = vshrl.u32 %v375, 7
        %v377 = vsub.s32 0, %v376
        %v378 = vrot.slane %v351, %v377
        %v380 = vadd.f32 %v373, %v378
        %v381 = vpack.c.bf16 %v380, %v380
        %v382 = vld [vmem:[#allocation5] sm:$0xf]
        %v383 = vld [vmem:[#allocation5 + $0x4] sm:$0xf]
        %v384 = vld [vmem:[#allocation5 + $0x8] sm:$0xf]
        %v385 = vld [vmem:[#allocation5 + $0xc] sm:$0xf]
        %v386 = vld [vmem:[%s4] sm:$0x1]
        %v388 = vlaneseq
        %v389 = vshrl.u32 %v388, 7
        %v390 = vsub.s32 0, %v389
        %v391 = vrot.slane %v386, %v390
        %v397 = vunpack.c.l.b16 %v382
        %v398 = vunpack.c.l.b16 %v383
        %v399 = vunpack.c.l.b16 %v384
        %v400 = vunpack.c.l.b16 %v385
        %v401 = vpack.c.b16 %v398, %v397
        %v402 = vpack.c.b16 %v400, %v399
        %v406 = vsel %vm352, %v381, 0
        %408 = vmatprep.subr.bf16.mxu0 0
        %409 = vmatpush1.bf16.msra.mxu0 %v401
        %410 = vmatprep.subr.bf16.mxu0 0
        %411 = vmatpush1.bf16.msra.mxu0 %v402
        %412 = vmatprep.subr.bf16.mxu0 0
        %413 = vmatpush1.bf16.msra.mxu0 0
        %414 = vmatprep.subr.bf16.mxu0 0
        %415 = vmatpush1.bf16.msra.mxu0 0
        %416 = vmatprep.subr.bf16.mxu0 0
        %417 = vmatpush1.bf16.msra.mxu0 0
        %418 = vmatprep.subr.bf16.mxu0 0
        %419 = vmatpush1.bf16.msra.mxu0 0
        %420 = vmatprep.subr.bf16.mxu0 0
        %421 = vmatpush1.bf16.msra.mxu0 0
        %422 = vmatprep.subr.bf16.mxu0 0
        %423 = vmatpush1.bf16.msra.mxu0 0
        %424 = vmatprep.subr.bf16.mxu0 0
        %425 = vmatpush1.bf16.msra.mxu0 0
        %426 = vmatprep.subr.bf16.mxu0 0
        %427 = vmatpush1.bf16.msra.mxu0 0
        %428 = vmatprep.subr.bf16.mxu0 0
        %429 = vmatpush1.bf16.msra.mxu0 0
        %430 = vmatprep.subr.bf16.mxu0 0
        %431 = vmatpush1.bf16.msra.mxu0 0
        %432 = vmatprep.subr.bf16.mxu0 0
        %433 = vmatpush1.bf16.msra.mxu0 0
        %434 = vmatprep.subr.bf16.mxu0 0
        %435 = vmatpush1.bf16.msra.mxu0 0
        %436 = vmatprep.subr.bf16.mxu0 0
        %437 = vmatpush1.bf16.msra.mxu0 0
        %438 = vmatprep.subr.bf16.mxu0 0
        %439 = vmatpush1.bf16.msra.mxu0 0
        %440 = vmatprep.mubr.bf16.mxu0 0
        %441 = vmatmul.mubr.bf16.gmra.mrb[0].mxu0 %v406
        %v442 = vpop.f32.mrb[0].mxu0
        %v443 = vadd.f32 %v391, %v442
        %v444 = vpop.f32.mrb[0].mxu0
        %v445 = vpop.f32.mrb[0].mxu0
        %v446 = vpop.f32.mrb[0].mxu0
        %447 = vdwg.mxu0
        %v448 = vmul.f32 %v443, 0.35355338
        %v449 = vpack.c.bf16 %v448, %v448
        %vm450 = vcmask 60416
        %451 = vst.msk [vmem:[%s333] sm:$0xf] %vm450, %v449
        %v452 = vpack.c.bf16 %v443, %v443
        %v454 = vunpack.c.l.b16 %v452
        %v455 = vpack.c.b16 %v454, %v454
        %456 = vrot.lane.b32.xlu0 %v455, 96
        %v457 = vpop.permute.xlu0 %456
        %459 = vst.msk [vmem:[%s340] sm:$0xf] %vm450, %v457
        %460 = vrot.lane.b32.xlu0 %v455, 64
        %v461 = vpop.permute.xlu0 %460
        %463 = vst.msk [vmem:[%s347] sm:$0xf] %vm450, %v461
        %v465 = vunpack.c.l.b16 %v449
        %v466 = vpack.c.b16 %v465, %v465
        %467 = vrot.lane.b32.xlu0 %v466, 120
        %v468 = vpop.permute.xlu0 %467
        %s470 = scalar_lea.vmem %s333, 4 [#allocation7]
        %471 = vst.msk [vmem:[%s470] sm:$0xf] %vm450, %v468
        %472 = vrot.lane.b32.xlu0 %v455, 88
        %v473 = vpop.permute.xlu0 %472
        %s475 = scalar_lea.vmem %s340, 4 [#allocation8]
        %476 = vst.msk [vmem:[%s475] sm:$0xf] %vm450, %v473
        %477 = vrot.lane.b32.xlu0 %v455, 56
        %v478 = vpop.permute.xlu0 %477
        %s480 = scalar_lea.vmem %s347, 4 [#allocation10]
        %481 = vst.msk [vmem:[%s480] sm:$0xf] %vm450, %v478
        %482 = vrot.lane.b32.xlu0 %v466, 112
        %v483 = vpop.permute.xlu0 %482
        %s485 = scalar_lea.vmem %s333, 8 [#allocation7]
        %486 = vst.msk [vmem:[%s485] sm:$0xf] %vm450, %v483
        %487 = vrot.lane.b32.xlu0 %v455, 80
        %v488 = vpop.permute.xlu0 %487
        %s490 = scalar_lea.vmem %s340, 8 [#allocation8]
        %491 = vst.msk [vmem:[%s490] sm:$0xf] %vm450, %v488
        %492 = vrot.lane.b32.xlu0 %v455, 48
        %v493 = vpop.permute.xlu0 %492
        %s495 = scalar_lea.vmem %s347, 8 [#allocation10]
        %496 = vst.msk [vmem:[%s495] sm:$0xf] %vm450, %v493
        %497 = vrot.lane.b32.xlu0 %v466, 104
        %v498 = vpop.permute.xlu0 %497
        %s500 = scalar_lea.vmem %s333, 12 [#allocation7]
        %501 = vst.msk [vmem:[%s500] sm:$0xf] %vm450, %v498
        %502 = vrot.lane.b32.xlu0 %v455, 72
        %v503 = vpop.permute.xlu0 %502
        %s505 = scalar_lea.vmem %s340, 12 [#allocation8]
        %506 = vst.msk [vmem:[%s505] sm:$0xf] %vm450, %v503
        %507 = vrot.lane.b32.xlu0 %v455, 40
        %v508 = vpop.permute.xlu0 %507
        %s510 = scalar_lea.vmem %s347, 12 [#allocation10]
        %511 = vst.msk [vmem:[%s510] sm:$0xf] %vm450, %v508
        %s512 = sand.u32 %s163, 1
        %s513 = scalar_lea.sflag [#allocation4], %s512
        %s514 = sand.u32 %s163, 1
        %s515 = smul.addr %s514, 16
        %s516 = scalar_lea.vmem [#allocation7], %s515
        %s517 = sand.u32 %s29, 1
        %s518 = scalar_lea.sflag [#allocation9], %s517
        %s519 = sand.u32 %s191, 1
        %s520 = smul.addr %s519, 16
        %s521 = scalar_lea.vmem [#allocation8], %s520
        %s522 = sand.u32 %s29, 1
        %s523 = scalar_lea.sflag [#allocation9], %s522
        %s524 = sand.u32 %s219, 1
        %s525 = smul.addr %s524, 16
        %s526 = scalar_lea.vmem [#allocation10], %s525
        // Predicated region
        $region49: #{tpu_custom_call.1} parent=39 // pred_check
          %p527 = pneg %p173
        $region50: #{tpu_custom_call.1} parent=39 // pred_check_branch
          %529 = sbr.rel (%p527) target = $region52
        $region51: #{tpu_custom_call.1} parent=39 // pred_region
          %s531 = ssub.s32 256, 256
          %532 = vsyncadd %s513, %s531
          %s533 = smul.addr %s33, 4
          %s534 = sadd.s32 %s34, %s533
          %s535 = smul.addr %s534, 64
          %s536 = scalar_lea.hbm %s5, %s535
          %s537 = sshll.u32 %s516, 4
          %s538 = int_to_ptr.vmem [resolvable:$true] %s537
          %543 = dma.vmem_to_hbm [thread:$0]  %s538, 256, %s536, %s513, 64, 64, 4
        $region52: #{tpu_custom_call.1} parent=39 // pred_fallthru
          _
        // Predicated region
        $region53: #{tpu_custom_call.1} parent=39 // pred_check
          %p544 = pneg %p201
        $region54: #{tpu_custom_call.1} parent=39 // pred_check_branch
          %546 = sbr.rel (%p544) target = $region56
        $region55: #{tpu_custom_call.1} parent=39 // pred_region
          %s548 = ssub.s32 256, 256
          %549 = vsyncadd %s518, %s548
          %s550 = smul.addr %s33, 4
          %s551 = sadd.s32 %s34, %s550
          %s552 = smul.addr %s551, 64
          %s553 = scalar_lea.hbm %s6, %s552
          %s554 = sshll.u32 %s521, 4
          %s555 = int_to_ptr.vmem [resolvable:$true] %s554
          %560 = dma.vmem_to_hbm [thread:$0]  %s555, 256, %s553, %s518, 64, 64, 4
        $region56: #{tpu_custom_call.1} parent=39 // pred_fallthru
          _
        // Predicated region
        $region57: #{tpu_custom_call.1} parent=39 // pred_check
          %p561 = pneg %p229
        $region58: #{tpu_custom_call.1} parent=39 // pred_check_branch
          %563 = sbr.rel (%p561) target = $region60
        $region59: #{tpu_custom_call.1} parent=39 // pred_region
          %s565 = ssub.s32 256, 256
          %566 = vsyncadd %s523, %s565
          %s567 = smul.addr %s33, 4
          %s568 = sadd.s32 %s34, %s567
          %s569 = smul.addr %s568, 64
          %s570 = scalar_lea.hbm %s7, %s569
          %s571 = sshll.u32 %s526, 4
          %s572 = int_to_ptr.vmem [resolvable:$true] %s571
          %577 = dma.vmem_to_hbm [thread:$0]  %s572, 256, %s570, %s523, 64, 64, 4
        $region60: #{tpu_custom_call.1} parent=39 // pred_fallthru
          _
      $region40: #{tpu_custom_call.1} parent=5 // pred_fallthru
        _
      %p578 = scmp.le.s32.totalorder 2, %s24
      // Predicated region
      $region61: #{tpu_custom_call.1} parent=5 // pred_check
        %p579 = pneg %p578
      $region62: #{tpu_custom_call.1} parent=5 // pred_check_branch
        %581 = sbr.rel (%p579) target = $region64
      $region63: #{tpu_custom_call.1} parent=5 // pred_region
        %s582 = ssub.s32 %s24, 2
        // Predicated region
        $region65: #{tpu_custom_call.1} parent=63 // pred_check
          %p583 = pneg %p179
        $region66: #{tpu_custom_call.1} parent=63 // pred_check_branch
          %585 = sbr.rel (%p583) target = $region68
        $region67: #{tpu_custom_call.1} parent=63 // pred_region
          %s586 = sand.u32 %s164, 1
          %s587 = scalar_lea.sflag [#allocation4], %s586
          %s588 = sand.u32 %s164, 1
          %s589 = smul.addr %s588, 16
          %s590 = scalar_lea.vmem [#allocation7], %s589
          %591 = dma.done %s587, 256
        $region68: #{tpu_custom_call.1} parent=63 // pred_fallthru
          _
        // Predicated region
        $region69: #{tpu_custom_call.1} parent=63 // pred_check
          %p592 = pneg %p207
        $region70: #{tpu_custom_call.1} parent=63 // pred_check_branch
          %594 = sbr.rel (%p592) target = $region72
        $region71: #{tpu_custom_call.1} parent=63 // pred_region
          %s595 = sand.u32 %s30, 1
          %s596 = scalar_lea.sflag [#allocation9], %s595
          %s597 = sand.u32 %s192, 1
          %s598 = smul.addr %s597, 16
          %s599 = scalar_lea.vmem [#allocation8], %s598
          %600 = dma.done %s596, 256
        $region72: #{tpu_custom_call.1} parent=63 // pred_fallthru
          _
        // Predicated region
        $region73: #{tpu_custom_call.1} parent=63 // pred_check
          %p601 = pneg %p235
        $region74: #{tpu_custom_call.1} parent=63 // pred_check_branch
          %603 = sbr.rel (%p601) target = $region76
        $region75: #{tpu_custom_call.1} parent=63 // pred_region
          %s604 = sand.u32 %s30, 1
          %s605 = scalar_lea.sflag [#allocation9], %s604
          %s606 = sand.u32 %s220, 1
          %s607 = smul.addr %s606, 16
          %s608 = scalar_lea.vmem [#allocation10], %s607
          %609 = dma.done %s605, 256
        $region76: #{tpu_custom_call.1} parent=63 // pred_fallthru
          _
      $region64: #{tpu_custom_call.1} parent=5 // pred_fallthru
        _
    $region6: #{tpu_custom_call.1} parent=1 // loop_footer
      %s28 = sadd.s32 1, %s24
    $region7: #{tpu_custom_call.1} parent=1 // loop_footer_branch
      %23 = sbr.rel target = $region3
    $region8: #{tpu_custom_call.1} parent=1 // loop_exit
      _
    %610 = vsyncpa [#allocation3], 1
    %s611 = scalar_lea.sflag [#allocation3], 1
    %612 = vsyncpa %s611, 1
    %613 = vsyncpa [#allocation6], 1
    %614 = vsyncpa [#allocation4], 1
    %s615 = scalar_lea.sflag [#allocation4], 1
    %616 = vsyncpa %s615, 1
    %617 = vsyncpa [#allocation9], 1
    %s618 = scalar_lea.sflag [#allocation9], 1
    %619 = vsyncpa %s618, 1

</llo_original>
